<compile_context>
chip_gen: v7x
topology: tpu7x:2x2x1
jax: 0.10.0
libtpu: 0.0.40
codegen_flags: <defaults>
</compile_context>

<pallas_src>
import jax
import jax.numpy as jnp
from jax.experimental import pallas as pl
from jax.experimental.pallas import tpu as pltpu


# ------------------------------ fused kernel --------------------------------
def _make_fused_kernel(method, hid, r_rows, r_pad):
    """r_rows: logical table rows; r_pad: rows padded up to a multiple of 8."""

    def kernel(*refs):
        if method == "concat":
            (ei_ref, xT_ref, w1T_ref, b1_ref, w2T_ref, b2_ref,
             a1_ref, a2_ref, o_ref, tbl_ref) = refs
        elif method == "bilinear":
            (ei_ref, xT_ref, w1T_ref, b1_ref, w2T_ref, b2_ref,
             wT_ref, o_ref, tbl_ref) = refs
        else:  # cosine
            (ei_ref, xT_ref, w1T_ref, b1_ref, w2T_ref, b2_ref,
             o_ref, tbl_ref) = refs

        n_nodes = tbl_ref.shape[1]
        two_t = ei_ref.shape[1]
        tile_e = two_t // 2

        # ---- stage 1: node MLP + per-node gather table, once at grid step 0 --
        # Everything that only depends on the node (not the edge) is hoisted
        # here; the table stays resident in VMEM across the whole edge grid.
        @pl.when(pl.program_id(0) == 0)
        def _():
            z = jnp.dot(w1T_ref[...], xT_ref[...],
                        preferred_element_type=jnp.float32)
            z = jnp.maximum(z + b1_ref[...], 0.0)                    # ReLU
            hT = jnp.dot(w2T_ref[...], z,
                         preferred_element_type=jnp.float32) + b2_ref[...]

            if method == "concat":
                # u_n = a1 . h_n ; v_n = a2 . h_n  -> score = tanh(u_src + v_dst)
                u = jnp.sum(hT * a1_ref[...], axis=0, keepdims=True)
                v = jnp.sum(hT * a2_ref[...], axis=0, keepdims=True)
                tbl = jnp.concatenate([u, v], axis=0)                # (2, N)
            elif method == "bilinear":
                # W^T h precomputed once -> no per-tile (hid,hid) matmul.
                whT = jnp.dot(wT_ref[...], hT,
                              preferred_element_type=jnp.float32)
                tbl = jnp.concatenate([hT, whT], axis=0)             # (2*hid, N)
            else:  # cosine: per-node inverse norm precomputed once (EUP rsqrt).
                n2 = jnp.sum(hT * hT, axis=0, keepdims=True)
                rinv = jax.lax.rsqrt(jnp.maximum(n2, jnp.float32(1e-16)))
                tbl = jnp.concatenate([hT, rinv], axis=0)            # (hid+1, N)

            if r_pad != r_rows:                                      # 8-align rows
                tbl = jnp.concatenate(
                    [tbl, jnp.zeros((r_pad - r_rows, n_nodes), jnp.float32)],
                    axis=0)

            # 2-plane bf16 split (tbl ~= p0 + p1, ~2^-16 relative error) stacked
            # into ONE scratch so the per-tile gather is a single bf16 matmul.
            p0 = tbl.astype(jnp.bfloat16)
            p1 = (tbl - p0.astype(jnp.float32)).astype(jnp.bfloat16)
            tbl_ref[...] = jnp.concatenate([p0, p1], axis=0)         # (2*r_pad, N)

        # ---- stage 2: combined src||dst gather via ONE bf16 MXU matmul -------
        idx = ei_ref[...]                                  # (1, 2*tile_e) int32
        iota_col = jax.lax.broadcasted_iota(jnp.int32, (n_nodes, 1), 0)
        onehot = (iota_col == idx).astype(jnp.bfloat16)    # (N, 2*tile_e)
        g = jnp.dot(tbl_ref[...], onehot,
                    preferred_element_type=jnp.float32)    # (2*r_pad, 2*tile_e)
        tg = g[0:r_pad, :] + g[r_pad:2 * r_pad, :]         # f32 reconstruct

        # ---- stage 3: per-edge score, lane-dense (1, tile_e) output ----------
        if method == "concat":
            s = tg[0:1, 0:tile_e] + tg[1:2, tile_e:two_t]
            res = jnp.tanh(s)
        elif method == "bilinear":
            xiT = tg[0:hid, 0:tile_e]
            wjT = tg[hid:2 * hid, tile_e:two_t]
            res = jnp.tanh(jnp.sum(xiT * wjT, axis=0, keepdims=True))
        else:  # cosine
            xiT = tg[0:hid, 0:tile_e]
            xjT = tg[0:hid, tile_e:two_t]
            ri = tg[hid:hid + 1, 0:tile_e]
            rj = tg[hid:hid + 1, tile_e:two_t]
            res = jnp.sum(xiT * xjT, axis=0, keepdims=True) * ri * rj

        o_ref[...] = res.astype(o_ref.dtype)               # (1, tile_e)

    return kernel


# ------------------------------ tiling helpers --------------------------------
def _pick_edge_tile(num_edges, n_pad, r_pad, max_tile=1024, budget=24 << 20):
    """Lane-dense edge tile: multiple of 128, big, >=2 grid steps when possible,
    and transient one-hot/gather intermediates within a VMEM budget (v7x-safe)."""
    def transient(t):
        lanes = 2 * t
        return n_pad * lanes * 2 + 3 * r_pad * lanes * 4   # onehot + gather + recon
    t = max_tile
    while t > 128 and (pl.cdiv(num_edges, t) < 2 or transient(t) > budget):
        t //= 2
    return t


def _vmem_limit_bytes(n_pad, c_in, hid, r_pad, tile_e):
    lanes = 2 * tile_e
    resident = (2 * r_pad * n_pad * 2                       # bf16 table scratch
                + c_in * n_pad * 4                          # x^T
                + (hid * c_in + 2 * hid * hid + 2 * hid) * 4)
    per_step = (n_pad * lanes * 2 + 3 * r_pad * lanes * 4
                + 2 * lanes * 4 + 2 * tile_e * 4)
    need = resident + 2 * per_step + (4 << 20)
    return int(min(max(need, 16 << 20), 48 << 20))          # <= v7x 64 MiB physical


# ------------------------------ module wrapper -------------------------------
def _glorot(key, shape):
    fan_in, fan_out = shape
    limit = (6.0 / (fan_in + fan_out)) ** 0.5
    return jax.random.uniform(key, shape, jnp.float32, -limit, limit)


class MGNNAttentionPallas:
    def __init__(self, in_channels, hidden_channels, dropout=0.0,
                 method="concat", key=jax.random.PRNGKey(0)):
        assert method in ("cosine", "concat", "bilinear")
        self.in_channels = in_channels
        self.hidden_channels = hidden_channels
        self.dropout = dropout                     # eval-mode identity
        self.method = method
        k1, k2, k3, k4 = jax.random.split(key, 4)
        # MLP([in, hid, hid]) params (weights stored [in, out]).
        self.w1 = _glorot(k1, (in_channels, hidden_channels))
        self.b1 = jnp.zeros((hidden_channels,), jnp.float32)
        self.w2 = _glorot(k2, (hidden_channels, hidden_channels))
        self.b2 = jnp.zeros((hidden_channels,), jnp.float32)
        # a: Linear(2*hid -> 1, bias=False); W: Linear(hid -> hid, bias=False).
        self.a_w = _glorot(k3, (2 * hidden_channels, 1))
        self.W_w = _glorot(k4, (hidden_channels, hidden_channels))

    def __call__(self, x, edge_index):
        n, c_in = x.shape
        hid = self.hidden_channels
        e = edge_index.shape[1]

        # method-specific gather-table rows (before the 2-plane split)
        if self.method == "concat":
            r_rows = 2
        elif self.method == "bilinear":
            r_rows = 2 * hid
        else:
            r_rows = hid + 1
        r_pad = ((r_rows + 7) // 8) * 8

        # nodes on lanes everywhere -> pad node count to a multiple of 128
        n_pad = ((n + 127) // 128) * 128

        tile_e = _pick_edge_tile(e, n_pad, r_pad)
        grid_e = pl.cdiv(e, tile_e)
        e_pad = grid_e * tile_e

        ei = edge_index.astype(jnp.int32)
        if e_pad != e:                              # padded edges point at node 0
            ei = jnp.pad(ei, ((0, 0), (0, e_pad - e)))
        # per-tile lane-concatenated [src_tile || dst_tile]  ->  (1, grid_e*2*tile_e)
        ei_packed = (ei.reshape(2, grid_e, tile_e)
                       .transpose(1, 0, 2)
                       .reshape(1, grid_e * 2 * tile_e))

        # transposed layout: channels on sublanes, nodes on lanes
        xT = x.T
        if n_pad != n:
            xT = jnp.pad(xT, ((0, 0), (0, n_pad - n)))
        w1T, w2T = self.w1.T, self.w2.T
        b1c, b2c = self.b1.reshape(-1, 1), self.b2.reshape(-1, 1)

        const = lambda i: (0, 0)
        in_specs = [
            pl.BlockSpec((1, 2 * tile_e), lambda i: (0, i)),   # packed edge indices
            pl.BlockSpec((c_in, n_pad), const),                # x^T (resident)
            pl.BlockSpec((hid, c_in), const),                  # W1^T
            pl.BlockSpec((hid, 1), const),                     # b1
            pl.BlockSpec((hid, hid), const),                   # W2^T
            pl.BlockSpec((hid, 1), const),                     # b2
        ]
        inputs = [ei_packed, xT, w1T, b1c, w2T, b2c]
        if self.method == "concat":
            in_specs += [pl.BlockSpec((hid, 1), const)] * 2
            inputs += [self.a_w[:hid], self.a_w[hid:]]
        elif self.method == "bilinear":
            in_specs += [pl.BlockSpec((hid, hid), const)]
            inputs += [self.W_w.T]

        out = pl.pallas_call(
            _make_fused_kernel(self.method, hid, r_rows, r_pad),
            out_shape=jax.ShapeDtypeStruct((1, e_pad), x.dtype),
            grid_spec=pltpu.PrefetchScalarGridSpec(
                num_scalar_prefetch=0,
                grid=(grid_e,),
                in_specs=in_specs,
                out_specs=pl.BlockSpec((1, tile_e), lambda i: (0, i)),
                # 2-plane bf16 gather table, resident across the edge grid
                scratch_shapes=[pltpu.VMEM((2 * r_pad, n_pad), jnp.bfloat16)],
            ),
            compiler_params=pltpu.CompilerParams(
                # table scratch is written at step 0 and reused -> serial axis
                dimension_semantics=("arbitrary",),
                vmem_limit_bytes=_vmem_limit_bytes(n_pad, c_in, hid, r_pad, tile_e),
            ),
        )(*inputs)
        return out[0, :e]


# --------------------------------- main --------------------------------------
if __name__ == "__main__":
    key = jax.random.PRNGKey(0)
    kx, ke0, ke1, kp = jax.random.split(key, 4)

    N, E = 128, 256
    IN_C, HID = 16, 32

    x = jax.random.normal(kx, (N, IN_C), jnp.float32)
    edge_index = jnp.stack([
        jax.random.randint(ke0, (E,), 0, N, jnp.int32),
        jax.random.randint(ke1, (E,), 0, N, jnp.int32),
    ])

    ok = True
    for method in ("concat", "bilinear", "cosine"):
        mod = MGNNAttentionPallas(IN_C, HID, dropout=0.0, method=method, key=kp)
        out = jax.block_until_ready(mod(x, edge_index))
        assert out.shape == (E,)

        # pure-JAX reference (same math as the torch module)
        h_ref = jnp.maximum(x @ mod.w1 + mod.b1, 0.0) @ mod.w2 + mod.b2
        xi, xj = h_ref[edge_index[0]], h_ref[edge_index[1]]
        if method == "concat":
            # == tanh(cat([xi, xj], 1) @ a_w).flatten(), written element-wise
            a1, a2 = mod.a_w[:HID, 0], mod.a_w[HID:, 0]
            ref = jnp.tanh(jnp.sum(xi * a1 + xj * a2, axis=1))
        elif method == "bilinear":
            ref = jnp.tanh(jnp.sum(xi * (xj @ mod.W_w), axis=1))
        else:
            dot = jnp.sum(xi * xj, axis=1)
            ni = jnp.maximum(jnp.linalg.norm(xi, axis=1), 1e-8)
            nj = jnp.maximum(jnp.linalg.norm(xj, axis=1), 1e-8)
            ref = dot / (ni * nj)
        ok &= bool(jnp.allclose(out, ref, atol=1e-4, rtol=1e-4))

    if ok:
        print("KERNEL_OK")
    else:
        print("KERNEL_MISMATCH")
</pallas_src>

<mosaic_0001>
module attributes {stable_mosaic.version = 11 : i64} {
  func.func @kernel(%arg0: i32, %arg1: memref<1x256xi32, #tpu.memory_space<vmem>>, %arg2: memref<16x128xf32, #tpu.memory_space<vmem>>, %arg3: memref<32x16xf32, #tpu.memory_space<vmem>>, %arg4: memref<32x1xf32, #tpu.memory_space<vmem>>, %arg5: memref<32x32xf32, #tpu.memory_space<vmem>>, %arg6: memref<32x1xf32, #tpu.memory_space<vmem>>, %arg7: memref<32x1xf32, #tpu.memory_space<vmem>>, %arg8: memref<32x1xf32, #tpu.memory_space<vmem>>, %arg9: memref<1x128xf32, #tpu.memory_space<vmem>>, %arg10: memref<16x128xbf16, #tpu.memory_space<vmem>>) attributes {dimension_semantics = [#tpu.dimension_semantics<arbitrary>], iteration_bounds = array<i64: 2>, scalar_prefetch = 0 : i64, scratch_operands = 1 : i64, tpu.core_type = #tpu.core_type<tc>, window_params = [{transform_indices = @transform_0, window_bounds = array<i64: 1, 256>}, {pipeline_mode = #tpu.pipeline_mode<synchronous>, transform_indices = @transform_1, window_bounds = array<i64: 16, 128>}, {pipeline_mode = #tpu.pipeline_mode<synchronous>, transform_indices = @transform_2, window_bounds = array<i64: 32, 16>}, {pipeline_mode = #tpu.pipeline_mode<synchronous>, transform_indices = @transform_3, window_bounds = array<i64: 32, 1>}, {pipeline_mode = #tpu.pipeline_mode<synchronous>, transform_indices = @transform_4, window_bounds = array<i64: 32, 32>}, {pipeline_mode = #tpu.pipeline_mode<synchronous>, transform_indices = @transform_5, window_bounds = array<i64: 32, 1>}, {pipeline_mode = #tpu.pipeline_mode<synchronous>, transform_indices = @transform_6, window_bounds = array<i64: 32, 1>}, {pipeline_mode = #tpu.pipeline_mode<synchronous>, transform_indices = @transform_7, window_bounds = array<i64: 32, 1>}, {transform_indices = @transform_8, window_bounds = array<i64: 1, 128>}]} {
    %c0_i32 = arith.constant 0 : i32
    %0 = arith.cmpi eq, %arg0, %c0_i32 : i32
    %1 = arith.extui %0 : i1 to i32
    %c0_i32_0 = arith.constant 0 : i32
    %2 = arith.cmpi ne, %1, %c0_i32_0 : i32
    scf.if %2 {
      %c0_6 = arith.constant 0 : index
      %c0_7 = arith.constant 0 : index
      %21 = vector.load %arg3[%c0_6, %c0_7] : memref<32x16xf32, #tpu.memory_space<vmem>>, vector<32x16xf32>
      %c0_8 = arith.constant 0 : index
      %c0_9 = arith.constant 0 : index
      %22 = vector.load %arg2[%c0_8, %c0_9] : memref<16x128xf32, #tpu.memory_space<vmem>>, vector<16x128xf32>
      %cst_10 = arith.constant dense<0.000000e+00> : vector<32x128xf32>
      %23 = tpu.matmul %21, %22, %cst_10 {dimension_numbers = #tpu.dot_dimension_numbers<[1], [0], [0], [1], [0, 0, 1, 1], [], []>} : vector<32x16xf32>, vector<16x128xf32>, vector<32x128xf32> -> vector<32x128xf32>
      %c0_11 = arith.constant 0 : index
      %c0_12 = arith.constant 0 : index
      %24 = vector.load %arg4[%c0_11, %c0_12] : memref<32x1xf32, #tpu.memory_space<vmem>>, vector<32x1xf32>
      %25 = vector.broadcast %24 : vector<32x1xf32> to vector<32x128xf32>
      %26 = arith.addf %23, %25 : vector<32x128xf32>
      %cst_13 = arith.constant 0.000000e+00 : f32
      %27 = vector.broadcast %cst_13 : f32 to vector<32x128xf32>
      %28 = arith.maximumf %26, %27 : vector<32x128xf32>
      %c0_14 = arith.constant 0 : index
      %c0_15 = arith.constant 0 : index
      %29 = vector.load %arg5[%c0_14, %c0_15] : memref<32x32xf32, #tpu.memory_space<vmem>>, vector<32x32xf32>
      %cst_16 = arith.constant dense<0.000000e+00> : vector<32x128xf32>
      %30 = tpu.matmul %29, %28, %cst_16 {dimension_numbers = #tpu.dot_dimension_numbers<[1], [0], [0], [1], [0, 0, 1, 1], [], []>} : vector<32x32xf32>, vector<32x128xf32>, vector<32x128xf32> -> vector<32x128xf32>
      %c0_17 = arith.constant 0 : index
      %c0_18 = arith.constant 0 : index
      %31 = vector.load %arg6[%c0_17, %c0_18] : memref<32x1xf32, #tpu.memory_space<vmem>>, vector<32x1xf32>
      %32 = vector.broadcast %31 : vector<32x1xf32> to vector<32x128xf32>
      %33 = arith.addf %30, %32 : vector<32x128xf32>
      %c0_19 = arith.constant 0 : index
      %c0_20 = arith.constant 0 : index
      %34 = vector.load %arg7[%c0_19, %c0_20] : memref<32x1xf32, #tpu.memory_space<vmem>>, vector<32x1xf32>
      %35 = vector.broadcast %34 : vector<32x1xf32> to vector<32x128xf32>
      %36 = arith.mulf %33, %35 : vector<32x128xf32>
      %cst_21 = arith.constant dense<0.000000e+00> : vector<128xf32>
      %37 = vector.multi_reduction <add>, %36, %cst_21 [0] : vector<32x128xf32> to vector<128xf32>
      %38 = vector.shape_cast %37 : vector<128xf32> to vector<1x128xf32>
      %c0_22 = arith.constant 0 : index
      %c0_23 = arith.constant 0 : index
      %39 = vector.load %arg8[%c0_22, %c0_23] : memref<32x1xf32, #tpu.memory_space<vmem>>, vector<32x1xf32>
      %40 = vector.broadcast %39 : vector<32x1xf32> to vector<32x128xf32>
      %41 = arith.mulf %33, %40 : vector<32x128xf32>
      %cst_24 = arith.constant dense<0.000000e+00> : vector<128xf32>
      %42 = vector.multi_reduction <add>, %41, %cst_24 [0] : vector<32x128xf32> to vector<128xf32>
      %43 = vector.shape_cast %42 : vector<128xf32> to vector<1x128xf32>
      %44 = tpu.concatenate %38, %43 in 0 : vector<1x128xf32>, vector<1x128xf32> -> vector<2x128xf32>
      %cst_25 = arith.constant 0.000000e+00 : f32
      %45 = vector.broadcast %cst_25 : f32 to vector<6x128xf32>
      %46 = tpu.concatenate %44, %45 in 0 : vector<2x128xf32>, vector<6x128xf32> -> vector<8x128xf32>
      %47 = arith.truncf %46 : vector<8x128xf32> to vector<8x128xbf16>
      %48 = arith.extf %47 : vector<8x128xbf16> to vector<8x128xf32>
      %49 = arith.subf %46, %48 : vector<8x128xf32>
      %50 = arith.truncf %49 : vector<8x128xf32> to vector<8x128xbf16>
      %51 = tpu.concatenate %47, %50 in 0 : vector<8x128xbf16>, vector<8x128xbf16> -> vector<16x128xbf16>
      %c0_26 = arith.constant 0 : index
      %c0_27 = arith.constant 0 : index
      %52 = vector.load %arg10[%c0_26, %c0_27] : memref<16x128xbf16, #tpu.memory_space<vmem>>, vector<16x128xbf16>
      tpu.vector_store %arg10[%c0_26, %c0_27], %51 {strides = array<i32>} : memref<16x128xbf16, #tpu.memory_space<vmem>>, vector<16x128xbf16>,
    } else {
    }
    %c0 = arith.constant 0 : index
    %c0_1 = arith.constant 0 : index
    %3 = vector.load %arg1[%c0, %c0_1] : memref<1x256xi32, #tpu.memory_space<vmem>>, vector<1x256xi32>
    %4 = tpu.iota {dimensions = array<i32: 0>} : vector<128x1xi32>
    %5 = vector.broadcast %4 : vector<128x1xi32> to vector<128x256xi32>
    %6 = vector.broadcast %3 : vector<1x256xi32> to vector<128x256xi32>
    %7 = arith.cmpi eq, %5, %6 : vector<128x256xi32>
    %8 = arith.extui %7 : vector<128x256xi1> to vector<128x256xi32>
    %9 = arith.sitofp %8 : vector<128x256xi32> to vector<128x256xf32>
    %10 = arith.truncf %9 : vector<128x256xf32> to vector<128x256xbf16>
    %c0_2 = arith.constant 0 : index
    %c0_3 = arith.constant 0 : index
    %11 = vector.load %arg10[%c0_2, %c0_3] : memref<16x128xbf16, #tpu.memory_space<vmem>>, vector<16x128xbf16>
    %cst = arith.constant dense<0.000000e+00> : vector<16x256xf32>
    %12 = tpu.matmul %11, %10, %cst {dimension_numbers = #tpu.dot_dimension_numbers<[1], [0], [0], [1], [0, 0, 1, 1], [], []>} : vector<16x128xbf16>, vector<128x256xbf16>, vector<16x256xf32> -> vector<16x256xf32>
    %13 = vector.extract_strided_slice %12 {offsets = [0, 0], sizes = [8, 256], strides = [1, 1]} : vector<16x256xf32> to vector<8x256xf32>
    %14 = vector.extract_strided_slice %12 {offsets = [8, 0], sizes = [8, 256], strides = [1, 1]} : vector<16x256xf32> to vector<8x256xf32>
    %15 = arith.addf %13, %14 : vector<8x256xf32>
    %16 = vector.extract_strided_slice %15 {offsets = [0, 0], sizes = [1, 128], strides = [1, 1]} : vector<8x256xf32> to vector<1x128xf32>
    %17 = vector.extract_strided_slice %15 {offsets = [1, 128], sizes = [1, 128], strides = [1, 1]} : vector<8x256xf32> to vector<1x128xf32>
    %18 = arith.addf %16, %17 : vector<1x128xf32>
    %19 = math.tanh %18 : vector<1x128xf32>
    %c0_4 = arith.constant 0 : index
    %c0_5 = arith.constant 0 : index
    %20 = vector.load %arg9[%c0_4, %c0_5] : memref<1x128xf32, #tpu.memory_space<vmem>>, vector<1x128xf32>
    tpu.vector_store %arg9[%c0_4, %c0_5], %19 {strides = array<i32>} : memref<1x128xf32, #tpu.memory_space<vmem>>, vector<1x128xf32>,
    return
  }
  func.func @transform_0(%arg0: i32) -> (i32, i32) {
    %c0_i32 = arith.constant 0 : i32
    %c0_i32_0 = arith.constant 0 : i32
    return %c0_i32, %arg0 : i32, i32
  }
  func.func @transform_1(%arg0: i32) -> (i32, i32) {
    %c0_i32 = arith.constant 0 : i32
    %c0_i32_0 = arith.constant 0 : i32
    %c0_i32_1 = arith.constant 0 : i32
    return %c0_i32, %c0_i32_0 : i32, i32
  }
  func.func @transform_2(%arg0: i32) -> (i32, i32) {
    %c0_i32 = arith.constant 0 : i32
    %c0_i32_0 = arith.constant 0 : i32
    %c0_i32_1 = arith.constant 0 : i32
    return %c0_i32, %c0_i32_0 : i32, i32
  }
  func.func @transform_3(%arg0: i32) -> (i32, i32) {
    %c0_i32 = arith.constant 0 : i32
    %c0_i32_0 = arith.constant 0 : i32
    %c0_i32_1 = arith.constant 0 : i32
    return %c0_i32, %c0_i32_0 : i32, i32
  }
  func.func @transform_4(%arg0: i32) -> (i32, i32) {
    %c0_i32 = arith.constant 0 : i32
    %c0_i32_0 = arith.constant 0 : i32
    %c0_i32_1 = arith.constant 0 : i32
    return %c0_i32, %c0_i32_0 : i32, i32
  }
  func.func @transform_5(%arg0: i32) -> (i32, i32) {
    %c0_i32 = arith.constant 0 : i32
    %c0_i32_0 = arith.constant 0 : i32
    %c0_i32_1 = arith.constant 0 : i32
    return %c0_i32, %c0_i32_0 : i32, i32
  }
  func.func @transform_6(%arg0: i32) -> (i32, i32) {
    %c0_i32 = arith.constant 0 : i32
    %c0_i32_0 = arith.constant 0 : i32
    %c0_i32_1 = arith.constant 0 : i32
    return %c0_i32, %c0_i32_0 : i32, i32
  }
  func.func @transform_7(%arg0: i32) -> (i32, i32) {
    %c0_i32 = arith.constant 0 : i32
    %c0_i32_0 = arith.constant 0 : i32
    %c0_i32_1 = arith.constant 0 : i32
    return %c0_i32, %c0_i32_0 : i32, i32
  }
  func.func @transform_8(%arg0: i32) -> (i32, i32) {
    %c0_i32 = arith.constant 0 : i32
    %c0_i32_0 = arith.constant 0 : i32
    return %c0_i32, %arg0 : i32, i32
  }
}

</mosaic_0001>

<llo_original>
// kernel: tpu_custom_call.1
$region0: #{tpu_custom_call.1}
  #allocation0 [shape = 'u32[]', space=smem, size = 0x4, offset = 0x4, fixed_abs, tag = 'smem constant byte address 0x4 - core index']
  #allocation1 [shape = 'u32[144,128]{1,0:T(1,128)}', space=vmem, size = 0x12000, scoped, tag = 'internal scratch']
  #allocation2 [shape = 'bf16[16,128]{1,0:T(16,128)(2,1)}', space=vmem, size = 0x1000, scoped, tag = 'scratch operand']
  %s0 = inlined_call_operand.vmem [shape: s32[1,512], index: 0, kind: input, shape index: {}]
  %s1 = inlined_call_operand.vmem [shape: f32[16,128], index: 1, kind: input, shape index: {}]
  %s2 = inlined_call_operand.vmem [shape: f32[32,16], index: 2, kind: input, shape index: {}]
  %s3 = inlined_call_operand.vmem [shape: f32[32,1], index: 3, kind: input, shape index: {}]
  %s4 = inlined_call_operand.vmem [shape: f32[32,32], index: 4, kind: input, shape index: {}]
  %s5 = inlined_call_operand.vmem [shape: f32[32,1], index: 5, kind: input, shape index: {}]
  %s6 = inlined_call_operand.vmem [shape: f32[32,1], index: 6, kind: input, shape index: {}]
  %s7 = inlined_call_operand.vmem [shape: f32[32,1], index: 7, kind: input, shape index: {}]
  %s8 = inlined_call_operand.hbm [shape: f32[1,256], index: 8, kind: output, shape index: {}]
  %s9 = sld [smem:[#allocation0]]
  $region69: #{tpu_custom_call.1} parent=0
    _
  %s11 = ssub.s32 1, %s9
  %s12 = scalar_select 0, %s11, %s9
  $region1: #{tpu_custom_call.1} parent=0
    #allocation3 [shape = 'u8[1024]{0}', space=vmem, size = 0x400, scoped, tag = 'output window, operand 0']
    #allocation4 [shape = 's32[2]{0}', space=sflag, size = 0x8, scoped, tag = 'scoped memory for tpu_custom_call.1']
    %13 = vsyncpa [#allocation4], 0
    %s14 = scalar_lea.sflag [#allocation4], 1
    %15 = vsyncpa %s14, 0
    loop: start=0, step=1, limit=4
    $region2: #{tpu_custom_call.1} parent=1 // loop_pre_header
      _
    $region3: #{tpu_custom_call.1} parent=1 // loop_header
      %s17 = sphi 0, %s21
      %p18 = scmp.ge.s32.totalorder %s17, 4
      %s27 = sphi 0, %s29
      %s30 = sphi 0, %s27
      %s31 = sphi 0, %s30
      %s47 = sphi 0, %s31
      %s51 = sphi 0, %s51
      %s53 = sphi 0, %s51
      %s54 = sphi 0, %s53
      %s68 = sphi 0, %s54
      %s72 = sphi 0, %s72
      %s74 = sphi 0, %s72
      %s75 = sphi 0, %s74
      %s89 = sphi 0, %s75
      %s93 = sphi 0, %s93
      %s95 = sphi 0, %s93
      %s96 = sphi 0, %s95
      %s110 = sphi 0, %s96
      %s114 = sphi 0, %s114
      %s116 = sphi 0, %s114
      %s117 = sphi 0, %s116
      %s131 = sphi 0, %s117
      %s135 = sphi 0, %s135
      %s137 = sphi 0, %s135
      %s138 = sphi 0, %s137
      %s152 = sphi 0, %s138
      %s156 = sphi 0, %s156
      %s158 = sphi 0, %s156
      %s159 = sphi 0, %s158
      %s173 = sphi 0, %s159
      %s177 = sphi 0, %s177
      %s179 = sphi 0, %s177
      %s180 = sphi 0, %s179
      %s194 = sphi 0, %s180
      %s200 = sphi 0, %s202
      %s203 = sphi 0, %s200
      %s204 = sphi 0, %s203
      %s220 = sphi 0, %s204
    $region4: #{tpu_custom_call.1} parent=1 // loop_header_branch
      %20 = sbr.rel (%p18) target = $region8
    $region5: #{tpu_custom_call.1} parent=1 // loop_body
      %s22 = ssub.s32 %s17, 1
      %s23 = ssub.s32 %s17, 2
      %s24 = sadd.s32 %s17, 1
      %s25 = ssub.s32 %s17, %s24
      %p26 = scmp.eq.s32.totalorder %s25, 0
      %s28 = sadd.s32 %s27, 1
      %s29 = scalar_select %p26, %s27, %s28
      %p32 = pneg %p26
      %p33 = scmp.eq.s32.totalorder %s17, 1
      %p34 = por %p32, %p33
      %p35 = scmp.ne.s32.totalorder %s27, %s30
      %p36 = scmp.eq.s32.totalorder %s17, 0
      %p37 = por %p35, %p36
      %p38 = scmp.ne.s32.totalorder %s27, %s30
      %p39 = scmp.eq.s32.totalorder %s22, 1
      %p40 = por %p38, %p39
      %p41 = scmp.ne.s32.totalorder %s30, %s31
      %p42 = scmp.eq.s32.totalorder %s22, 0
      %p43 = por %p41, %p42
      %p44 = scmp.ne.s32.totalorder %s30, %s31
      %p45 = scmp.eq.s32.totalorder %s23, 1
      %p46 = por %p44, %p45
      %p48 = scmp.ne.s32.totalorder %s31, %s47
      %p49 = scmp.eq.s32.totalorder %s23, 0
      %p50 = por %p48, %p49
      %s52 = sadd.s32 %s51, 1
      %p55 = scmp.eq.s32.totalorder %s17, 1
      %p56 = scmp.ne.s32.totalorder %s51, %s53
      %p57 = scmp.eq.s32.totalorder %s17, 0
      %p58 = por %p56, %p57
      %p59 = scmp.ne.s32.totalorder %s51, %s53
      %p60 = scmp.eq.s32.totalorder %s22, 1
      %p61 = por %p59, %p60
      %p62 = scmp.ne.s32.totalorder %s53, %s54
      %p63 = scmp.eq.s32.totalorder %s22, 0
      %p64 = por %p62, %p63
      %p65 = scmp.ne.s32.totalorder %s53, %s54
      %p66 = scmp.eq.s32.totalorder %s23, 1
      %p67 = por %p65, %p66
      %p69 = scmp.ne.s32.totalorder %s54, %s68
      %p70 = scmp.eq.s32.totalorder %s23, 0
      %p71 = por %p69, %p70
      %s73 = sadd.s32 %s72, 1
      %p76 = scmp.eq.s32.totalorder %s17, 1
      %p77 = scmp.ne.s32.totalorder %s72, %s74
      %p78 = scmp.eq.s32.totalorder %s17, 0
      %p79 = por %p77, %p78
      %p80 = scmp.ne.s32.totalorder %s72, %s74
      %p81 = scmp.eq.s32.totalorder %s22, 1
      %p82 = por %p80, %p81
      %p83 = scmp.ne.s32.totalorder %s74, %s75
      %p84 = scmp.eq.s32.totalorder %s22, 0
      %p85 = por %p83, %p84
      %p86 = scmp.ne.s32.totalorder %s74, %s75
      %p87 = scmp.eq.s32.totalorder %s23, 1
      %p88 = por %p86, %p87
      %p90 = scmp.ne.s32.totalorder %s75, %s89
      %p91 = scmp.eq.s32.totalorder %s23, 0
      %p92 = por %p90, %p91
      %s94 = sadd.s32 %s93, 1
      %p97 = scmp.eq.s32.totalorder %s17, 1
      %p98 = scmp.ne.s32.totalorder %s93, %s95
      %p99 = scmp.eq.s32.totalorder %s17, 0
      %p100 = por %p98, %p99
      %p101 = scmp.ne.s32.totalorder %s93, %s95
      %p102 = scmp.eq.s32.totalorder %s22, 1
      %p103 = por %p101, %p102
      %p104 = scmp.ne.s32.totalorder %s95, %s96
      %p105 = scmp.eq.s32.totalorder %s22, 0
      %p106 = por %p104, %p105
      %p107 = scmp.ne.s32.totalorder %s95, %s96
      %p108 = scmp.eq.s32.totalorder %s23, 1
      %p109 = por %p107, %p108
      %p111 = scmp.ne.s32.totalorder %s96, %s110
      %p112 = scmp.eq.s32.totalorder %s23, 0
      %p113 = por %p111, %p112
      %s115 = sadd.s32 %s114, 1
      %p118 = scmp.eq.s32.totalorder %s17, 1
      %p119 = scmp.ne.s32.totalorder %s114, %s116
      %p120 = scmp.eq.s32.totalorder %s17, 0
      %p121 = por %p119, %p120
      %p122 = scmp.ne.s32.totalorder %s114, %s116
      %p123 = scmp.eq.s32.totalorder %s22, 1
      %p124 = por %p122, %p123
      %p125 = scmp.ne.s32.totalorder %s116, %s117
      %p126 = scmp.eq.s32.totalorder %s22, 0
      %p127 = por %p125, %p126
      %p128 = scmp.ne.s32.totalorder %s116, %s117
      %p129 = scmp.eq.s32.totalorder %s23, 1
      %p130 = por %p128, %p129
      %p132 = scmp.ne.s32.totalorder %s117, %s131
      %p133 = scmp.eq.s32.totalorder %s23, 0
      %p134 = por %p132, %p133
      %s136 = sadd.s32 %s135, 1
      %p139 = scmp.eq.s32.totalorder %s17, 1
      %p140 = scmp.ne.s32.totalorder %s135, %s137
      %p141 = scmp.eq.s32.totalorder %s17, 0
      %p142 = por %p140, %p141
      %p143 = scmp.ne.s32.totalorder %s135, %s137
      %p144 = scmp.eq.s32.totalorder %s22, 1
      %p145 = por %p143, %p144
      %p146 = scmp.ne.s32.totalorder %s137, %s138
      %p147 = scmp.eq.s32.totalorder %s22, 0
      %p148 = por %p146, %p147
      %p149 = scmp.ne.s32.totalorder %s137, %s138
      %p150 = scmp.eq.s32.totalorder %s23, 1
      %p151 = por %p149, %p150
      %p153 = scmp.ne.s32.totalorder %s138, %s152
      %p154 = scmp.eq.s32.totalorder %s23, 0
      %p155 = por %p153, %p154
      %s157 = sadd.s32 %s156, 1
      %p160 = scmp.eq.s32.totalorder %s17, 1
      %p161 = scmp.ne.s32.totalorder %s156, %s158
      %p162 = scmp.eq.s32.totalorder %s17, 0
      %p163 = por %p161, %p162
      %p164 = scmp.ne.s32.totalorder %s156, %s158
      %p165 = scmp.eq.s32.totalorder %s22, 1
      %p166 = por %p164, %p165
      %p167 = scmp.ne.s32.totalorder %s158, %s159
      %p168 = scmp.eq.s32.totalorder %s22, 0
      %p169 = por %p167, %p168
      %p170 = scmp.ne.s32.totalorder %s158, %s159
      %p171 = scmp.eq.s32.totalorder %s23, 1
      %p172 = por %p170, %p171
      %p174 = scmp.ne.s32.totalorder %s159, %s173
      %p175 = scmp.eq.s32.totalorder %s23, 0
      %p176 = por %p174, %p175
      %s178 = sadd.s32 %s177, 1
      %p181 = scmp.eq.s32.totalorder %s17, 1
      %p182 = scmp.ne.s32.totalorder %s177, %s179
      %p183 = scmp.eq.s32.totalorder %s17, 0
      %p184 = por %p182, %p183
      %p185 = scmp.ne.s32.totalorder %s177, %s179
      %p186 = scmp.eq.s32.totalorder %s22, 1
      %p187 = por %p185, %p186
      %p188 = scmp.ne.s32.totalorder %s179, %s180
      %p189 = scmp.eq.s32.totalorder %s22, 0
      %p190 = por %p188, %p189
      %p191 = scmp.ne.s32.totalorder %s179, %s180
      %p192 = scmp.eq.s32.totalorder %s23, 1
      %p193 = por %p191, %p192
      %p195 = scmp.ne.s32.totalorder %s180, %s194
      %p196 = scmp.eq.s32.totalorder %s23, 0
      %p197 = por %p195, %p196
      %s198 = ssub.s32 %s17, %s24
      %p199 = scmp.eq.s32.totalorder %s198, 0
      %s201 = sadd.s32 %s200, 1
      %s202 = scalar_select %p199, %s200, %s201
      %p205 = pneg %p199
      %p206 = scmp.eq.s32.totalorder %s17, 1
      %p207 = por %p205, %p206
      %p208 = scmp.ne.s32.totalorder %s200, %s203
      %p209 = scmp.eq.s32.totalorder %s17, 0
      %p210 = por %p208, %p209
      %p211 = scmp.ne.s32.totalorder %s200, %s203
      %p212 = scmp.eq.s32.totalorder %s22, 1
      %p213 = por %p211, %p212
      %p214 = scmp.ne.s32.totalorder %s203, %s204
      %p215 = scmp.eq.s32.totalorder %s22, 0
      %p216 = por %p214, %p215
      %p217 = scmp.ne.s32.totalorder %s203, %s204
      %p218 = scmp.eq.s32.totalorder %s23, 1
      %p219 = por %p217, %p218
      %p221 = scmp.ne.s32.totalorder %s204, %s220
      %p222 = scmp.eq.s32.totalorder %s23, 0
      %p223 = por %p221, %p222
      %p224 = scmp.le.s32.totalorder 1, %s17
      %p225 = scmp.lt.s32.totalorder %s17, 3
      %p226 = pnand %p224, %p225
      %p227 = pneg %p226
      // Predicated region
      $region9: #{tpu_custom_call.1} parent=5 // pred_check
        _
      $region10: #{tpu_custom_call.1} parent=5 // pred_check_branch
        %229 = sbr.rel (%p226) target = $region12
      $region11: #{tpu_custom_call.1} parent=5 // pred_region
        %s230 = ssub.s32 %s17, 1
        // Predicated region
        $region13: #{tpu_custom_call.1} parent=11 // pred_check
          %p231 = pneg %p64
        $region14: #{tpu_custom_call.1} parent=11 // pred_check_branch
          %233 = sbr.rel (%p231) target = $region16
        $region15: #{tpu_custom_call.1} parent=11 // pred_region
          _
        $region16: #{tpu_custom_call.1} parent=11 // pred_fallthru
          _
        // Predicated region
        $region17: #{tpu_custom_call.1} parent=11 // pred_check
          %p234 = pneg %p85
        $region18: #{tpu_custom_call.1} parent=11 // pred_check_branch
          %236 = sbr.rel (%p234) target = $region20
        $region19: #{tpu_custom_call.1} parent=11 // pred_region
          _
        $region20: #{tpu_custom_call.1} parent=11 // pred_fallthru
          _
        // Predicated region
        $region21: #{tpu_custom_call.1} parent=11 // pred_check
          %p237 = pneg %p106
        $region22: #{tpu_custom_call.1} parent=11 // pred_check_branch
          %239 = sbr.rel (%p237) target = $region24
        $region23: #{tpu_custom_call.1} parent=11 // pred_region
          _
        $region24: #{tpu_custom_call.1} parent=11 // pred_fallthru
          _
        // Predicated region
        $region25: #{tpu_custom_call.1} parent=11 // pred_check
          %p240 = pneg %p127
        $region26: #{tpu_custom_call.1} parent=11 // pred_check_branch
          %242 = sbr.rel (%p240) target = $region28
        $region27: #{tpu_custom_call.1} parent=11 // pred_region
          _
        $region28: #{tpu_custom_call.1} parent=11 // pred_fallthru
          _
        // Predicated region
        $region29: #{tpu_custom_call.1} parent=11 // pred_check
          %p243 = pneg %p148
        $region30: #{tpu_custom_call.1} parent=11 // pred_check_branch
          %245 = sbr.rel (%p243) target = $region32
        $region31: #{tpu_custom_call.1} parent=11 // pred_region
          _
        $region32: #{tpu_custom_call.1} parent=11 // pred_fallthru
          _
        // Predicated region
        $region33: #{tpu_custom_call.1} parent=11 // pred_check
          %p246 = pneg %p169
        $region34: #{tpu_custom_call.1} parent=11 // pred_check_branch
          %248 = sbr.rel (%p246) target = $region36
        $region35: #{tpu_custom_call.1} parent=11 // pred_region
          _
        $region36: #{tpu_custom_call.1} parent=11 // pred_fallthru
          _
        // Predicated region
        $region37: #{tpu_custom_call.1} parent=11 // pred_check
          %p249 = pneg %p190
        $region38: #{tpu_custom_call.1} parent=11 // pred_check_branch
          %251 = sbr.rel (%p249) target = $region40
        $region39: #{tpu_custom_call.1} parent=11 // pred_region
          _
        $region40: #{tpu_custom_call.1} parent=11 // pred_fallthru
          _
      $region12: #{tpu_custom_call.1} parent=5 // pred_fallthru
        _
      %p252 = scmp.lt.s32.totalorder %s17, 2
      // Predicated region
      $region41: #{tpu_custom_call.1} parent=5 // pred_check
        %p253 = pneg %p252
      $region42: #{tpu_custom_call.1} parent=5 // pred_check_branch
        %255 = sbr.rel (%p253) target = $region44
      $region43: #{tpu_custom_call.1} parent=5 // pred_region
        // Predicated region
        $region45: #{tpu_custom_call.1} parent=43 // pred_check
          %p256 = pneg %p37
        $region46: #{tpu_custom_call.1} parent=43 // pred_check_branch
          %258 = sbr.rel (%p256) target = $region48
        $region47: #{tpu_custom_call.1} parent=43 // pred_region
          %s259 = smul.u32 2, %s17
          %p260 = scmp.lt.s32.totalorder %s259, 3
          %s261 = scalar_select %p260, %s259, 3
          %s262 = scalar_lea.vmem %s0, %s261
          %s263 = smul.u32 2, %s17
        $region48: #{tpu_custom_call.1} parent=43 // pred_fallthru
          _
      $region44: #{tpu_custom_call.1} parent=5 // pred_fallthru
        _
      %p264 = scmp.le.s32.totalorder 1, %s17
      %p265 = scmp.lt.s32.totalorder %s17, 3
      %p266 = pnand %p264, %p265
      %p267 = pneg %p266
      // Predicated region
      $region49: #{tpu_custom_call.1} parent=5 // pred_check
        _
      $region50: #{tpu_custom_call.1} parent=5 // pred_check_branch
        %269 = sbr.rel (%p266) target = $region52
      $region51: #{tpu_custom_call.1} parent=5 // pred_region
        %s270 = ssub.s32 %s17, 1
        %s271 = smul.u32 2, %s22
        %p272 = scmp.lt.s32.totalorder %s271, 3
        %s273 = scalar_select %p272, %s271, 3
        %s274 = scalar_lea.vmem %s0, %s273
        %p275 = pneg %p43
        %p276 = pneg %p40
        %p277 = pneg %p64
        %p278 = pneg %p61
        %p279 = pneg %p85
        %p280 = pneg %p82
        %p281 = pneg %p106
        %p282 = pneg %p103
        %p283 = pneg %p127
        %p284 = pneg %p124
        %p285 = pneg %p148
        %p286 = pneg %p145
        %p287 = pneg %p169
        %p288 = pneg %p166
        %p289 = pneg %p190
        %p290 = pneg %p187
        %p291 = pneg %p216
        %p292 = pneg %p213
        %s293 = sand.u32 %s203, 1
        %s294 = scalar_lea.sflag [#allocation4], %s293
        %s295 = sand.u32 %s203, 1
        %s296 = scalar_lea.vmem [#allocation3], %s295
        %s297 = smul.u32 2, %s22
        %p298 = scmp.lt.s32.totalorder %s297, 3
        %s299 = scalar_select %p298, %s297, 3
        %s300 = scalar_lea.vmem %s0, %s299
        %s301 = smul.u32 2, %s22
        %p303 = scmp.eq.s32.totalorder %s22, 0
        // Predicated region
        $region53: #{tpu_custom_call.1} parent=51 // pred_check
          %p304 = pneg %p303
        $region54: #{tpu_custom_call.1} parent=51 // pred_check_branch
          %306 = sbr.rel (%p304) target = $region56
        $region55: #{tpu_custom_call.1} parent=51 // pred_region
          %v307 = vld [vmem:[%s2] sm:$0xff]
          %v308 = vld [vmem:[%s2 + $0x8] sm:$0xff]
          %v309 = vld [vmem:[%s2 + $0x10] sm:$0xff]
          %v310 = vld [vmem:[%s2 + $0x18] sm:$0xff]
          %v311 = vld [vmem:[%s1] sm:$0xff]
          %v312 = vld [vmem:[%s1 + $0x8] sm:$0xff]
          %v313 = vld [vmem:[%s3] sm:$0xff]
          %v314 = vld [vmem:[%s3 + $0x8] sm:$0xff]
          %v315 = vld [vmem:[%s3 + $0x10] sm:$0xff]
          %v316 = vld [vmem:[%s3 + $0x18] sm:$0xff]
          %318 = vset.pattern.permute.xlu0 0
          %319 = vperm.xlu0 %318, %v313
          %v320 = vpop.permute.xlu0 %319
          %323 = vset.pattern.permute.xlu0 0
          %324 = vperm.xlu0 %323, %v314
          %v325 = vpop.permute.xlu0 %324
          %328 = vset.pattern.permute.xlu0 0
          %329 = vperm.xlu0 %328, %v315
          %v330 = vpop.permute.xlu0 %329
          %333 = vset.pattern.permute.xlu0 0
          %334 = vperm.xlu0 %333, %v316
          %v335 = vpop.permute.xlu0 %334
          %vm337 = vcmask 130048
          %v339 = vsel %vm337, %v307, 0
          %v342 = vsel %vm337, %v308, 0
          %v345 = vsel %vm337, %v309, 0
          %v348 = vsel %vm337, %v310, 0
          %350 = vmatprep.subr.mxu0 0.0
          %351 = vmatpush1.msra.mxu0 %v311
          %352 = vmatprep.subr.mxu0 0.0
          %353 = vmatpush1.msra.mxu0 %v312
          %354 = vmatprep.subr.mxu0 0.0
          %355 = vmatpush1.msra.mxu0 0.0
          %356 = vmatprep.subr.mxu0 0.0
          %357 = vmatpush1.msra.mxu0 0.0
          %358 = vmatprep.subr.mxu0 0.0
          %359 = vmatpush1.msra.mxu0 0.0
          %360 = vmatprep.subr.mxu0 0.0
          %361 = vmatpush1.msra.mxu0 0.0
          %362 = vmatprep.subr.mxu0 0.0
          %363 = vmatpush1.msra.mxu0 0.0
          %364 = vmatprep.subr.mxu0 0.0
          %365 = vmatpush1.msra.mxu0 0.0
          %366 = vmatprep.subr.mxu0 0.0
          %367 = vmatpush1.msra.mxu0 0.0
          %368 = vmatprep.subr.mxu0 0.0
          %369 = vmatpush1.msra.mxu0 0.0
          %370 = vmatprep.subr.mxu0 0.0
          %371 = vmatpush1.msra.mxu0 0.0
          %372 = vmatprep.subr.mxu0 0.0
          %373 = vmatpush1.msra.mxu0 0.0
          %374 = vmatprep.subr.mxu0 0.0
          %375 = vmatpush1.msra.mxu0 0.0
          %376 = vmatprep.subr.mxu0 0.0
          %377 = vmatpush1.msra.mxu0 0.0
          %378 = vmatprep.subr.mxu0 0.0
          %379 = vmatpush1.msra.mxu0 0.0
          %380 = vmatprep.subr.mxu0 0.0
          %381 = vmatpush1.msra.mxu0 0.0
          %382 = vmatprep.subr.mxu0 0.0
          %383 = vmatpush1.msra.mxu0 0.0
          %384 = vmatprep.subr.mxu0 0.0
          %385 = vmatpush1.msra.mxu0 0.0
          %386 = vmatprep.subr.mxu0 0.0
          %387 = vmatpush1.msra.mxu0 0.0
          %388 = vmatprep.subr.mxu0 0.0
          %389 = vmatpush1.msra.mxu0 0.0
          %390 = vmatprep.subr.mxu0 0.0
          %391 = vmatpush1.msra.mxu0 0.0
          %392 = vmatprep.subr.mxu0 0.0
          %393 = vmatpush1.msra.mxu0 0.0
          %394 = vmatprep.subr.mxu0 0.0
          %395 = vmatpush1.msra.mxu0 0.0
          %396 = vmatprep.subr.mxu0 0.0
          %397 = vmatpush1.msra.mxu0 0.0
          %398 = vmatprep.subr.mxu0 0.0
          %399 = vmatpush1.msra.mxu0 0.0
          %400 = vmatprep.subr.mxu0 0.0
          %401 = vmatpush1.msra.mxu0 0.0
          %402 = vmatprep.subr.mxu0 0.0
          %403 = vmatpush1.msra.mxu0 0.0
          %404 = vmatprep.subr.mxu0 0.0
          %405 = vmatpush1.msra.mxu0 0.0
          %406 = vmatprep.subr.mxu0 0.0
          %407 = vmatpush1.msra.mxu0 0.0
          %408 = vmatprep.subr.mxu0 0.0
          %409 = vmatpush1.msra.mxu0 0.0
          %410 = vmatprep.subr.mxu0 0.0
          %411 = vmatpush1.msra.mxu0 0.0
          %412 = vmatprep.subr.mxu0 0.0
          %413 = vmatpush1.msra.mxu0 0.0
          %414 = vmatprep.mubr.f32.mxu0 0.0
          %415 = vmatmul.mubr.f32.gmra.mrb[0].mxu0 %v339
          %v416 = vpop.f32.mrb[0].mxu0
          %v417 = vadd.f32 %v320, %v416
          %v418 = vpop.f32.mrb[0].mxu0
          %419 = vmatprep.mubr.f32.mxu0 0.0
          %420 = vmatmul.mubr.f32.gmra.mrb[0].mxu0 %v342
          %v421 = vpop.f32.mrb[0].mxu0
          %v422 = vadd.f32 %v325, %v421
          %v423 = vpop.f32.mrb[0].mxu0
          %424 = vmatprep.mubr.f32.mxu0 0.0
          %425 = vmatmul.mubr.f32.gmra.mrb[0].mxu0 %v345
          %v426 = vpop.f32.mrb[0].mxu0
          %v427 = vadd.f32 %v330, %v426
          %v428 = vpop.f32.mrb[0].mxu0
          %429 = vmatprep.mubr.f32.mxu0 0.0
          %430 = vmatmul.mubr.f32.gmra.mrb[0].mxu0 %v348
          %v431 = vpop.f32.mrb[0].mxu0
          %v432 = vadd.f32 %v335, %v431
          %v433 = vpop.f32.mrb[0].mxu0
          %434 = vdwg.mxu0
          %v435 = vmax.f32 %v417, 0.0
          %v436 = vmax.f32 %v422, 0.0
          %v437 = vmax.f32 %v427, 0.0
          %v438 = vmax.f32 %v432, 0.0
          %v439 = vld [vmem:[%s4] sm:$0xff]
          %v440 = vld [vmem:[%s4 + $0x8] sm:$0xff]
          %v441 = vld [vmem:[%s4 + $0x10] sm:$0xff]
          %v442 = vld [vmem:[%s4 + $0x18] sm:$0xff]
          %v443 = vld [vmem:[%s5] sm:$0xff]
          %v444 = vld [vmem:[%s5 + $0x8] sm:$0xff]
          %v445 = vld [vmem:[%s5 + $0x10] sm:$0xff]
          %v446 = vld [vmem:[%s5 + $0x18] sm:$0xff]
          %448 = vset.pattern.permute.xlu0 0
          %449 = vperm.xlu0 %448, %v443
          %v450 = vpop.permute.xlu0 %449
          %453 = vset.pattern.permute.xlu0 0
          %454 = vperm.xlu0 %453, %v444
          %v455 = vpop.permute.xlu0 %454
          %458 = vset.pattern.permute.xlu0 0
          %459 = vperm.xlu0 %458, %v445
          %v460 = vpop.permute.xlu0 %459
          %463 = vset.pattern.permute.xlu0 0
          %464 = vperm.xlu0 %463, %v446
          %v465 = vpop.permute.xlu0 %464
          %vm467 = vcmask 261120
          %v469 = vsel %vm467, %v439, 0
          %v472 = vsel %vm467, %v440, 0
          %v475 = vsel %vm467, %v441, 0
          %v478 = vsel %vm467, %v442, 0
          %480 = vmatprep.subr.mxu0 0.0
          %481 = vmatpush1.msra.mxu0 %v435
          %482 = vmatprep.subr.mxu0 0.0
          %483 = vmatpush1.msra.mxu0 %v436
          %484 = vmatprep.subr.mxu0 0.0
          %485 = vmatpush1.msra.mxu0 %v437
          %486 = vmatprep.subr.mxu0 0.0
          %487 = vmatpush1.msra.mxu0 %v438
          %488 = vmatprep.subr.mxu0 0.0
          %489 = vmatpush1.msra.mxu0 0.0
          %490 = vmatprep.subr.mxu0 0.0
          %491 = vmatpush1.msra.mxu0 0.0
          %492 = vmatprep.subr.mxu0 0.0
          %493 = vmatpush1.msra.mxu0 0.0
          %494 = vmatprep.subr.mxu0 0.0
          %495 = vmatpush1.msra.mxu0 0.0
          %496 = vmatprep.subr.mxu0 0.0
          %497 = vmatpush1.msra.mxu0 0.0
          %498 = vmatprep.subr.mxu0 0.0
          %499 = vmatpush1.msra.mxu0 0.0
          %500 = vmatprep.subr.mxu0 0.0
          %501 = vmatpush1.msra.mxu0 0.0
          %502 = vmatprep.subr.mxu0 0.0
          %503 = vmatpush1.msra.mxu0 0.0
          %504 = vmatprep.subr.mxu0 0.0
          %505 = vmatpush1.msra.mxu0 0.0
          %506 = vmatprep.subr.mxu0 0.0
          %507 = vmatpush1.msra.mxu0 0.0
          %508 = vmatprep.subr.mxu0 0.0
          %509 = vmatpush1.msra.mxu0 0.0
          %510 = vmatprep.subr.mxu0 0.0
          %511 = vmatpush1.msra.mxu0 0.0
          %512 = vmatprep.subr.mxu0 0.0
          %513 = vmatpush1.msra.mxu0 0.0
          %514 = vmatprep.subr.mxu0 0.0
          %515 = vmatpush1.msra.mxu0 0.0
          %516 = vmatprep.subr.mxu0 0.0
          %517 = vmatpush1.msra.mxu0 0.0
          %518 = vmatprep.subr.mxu0 0.0
          %519 = vmatpush1.msra.mxu0 0.0
          %520 = vmatprep.subr.mxu0 0.0
          %521 = vmatpush1.msra.mxu0 0.0
          %522 = vmatprep.subr.mxu0 0.0
          %523 = vmatpush1.msra.mxu0 0.0
          %524 = vmatprep.subr.mxu0 0.0
          %525 = vmatpush1.msra.mxu0 0.0
          %526 = vmatprep.subr.mxu0 0.0
          %527 = vmatpush1.msra.mxu0 0.0
          %528 = vmatprep.subr.mxu0 0.0
          %529 = vmatpush1.msra.mxu0 0.0
          %530 = vmatprep.subr.mxu0 0.0
          %531 = vmatpush1.msra.mxu0 0.0
          %532 = vmatprep.subr.mxu0 0.0
          %533 = vmatpush1.msra.mxu0 0.0
          %534 = vmatprep.subr.mxu0 0.0
          %535 = vmatpush1.msra.mxu0 0.0
          %536 = vmatprep.subr.mxu0 0.0
          %537 = vmatpush1.msra.mxu0 0.0
          %538 = vmatprep.subr.mxu0 0.0
          %539 = vmatpush1.msra.mxu0 0.0
          %540 = vmatprep.subr.mxu0 0.0
          %541 = vmatpush1.msra.mxu0 0.0
          %542 = vmatprep.subr.mxu0 0.0
          %543 = vmatpush1.msra.mxu0 0.0
          %544 = vmatprep.mubr.f32.mxu0 0.0
          %545 = vmatmul.mubr.f32.gmra.mrb[0].mxu0 %v469
          %v546 = vpop.f32.mrb[0].mxu0
          %v547 = vadd.f32 %v450, %v546
          %v548 = vpop.f32.mrb[0].mxu0
          %549 = vmatprep.mubr.f32.mxu0 0.0
          %550 = vmatmul.mubr.f32.gmra.mrb[0].mxu0 %v472
          %v551 = vpop.f32.mrb[0].mxu0
          %v552 = vadd.f32 %v455, %v551
          %v553 = vpop.f32.mrb[0].mxu0
          %554 = vmatprep.mubr.f32.mxu0 0.0
          %555 = vmatmul.mubr.f32.gmra.mrb[0].mxu0 %v475
          %v556 = vpop.f32.mrb[0].mxu0
          %v557 = vadd.f32 %v460, %v556
          %v558 = vpop.f32.mrb[0].mxu0
          %559 = vmatprep.mubr.f32.mxu0 0.0
          %560 = vmatmul.mubr.f32.gmra.mrb[0].mxu0 %v478
          %v561 = vpop.f32.mrb[0].mxu0
          %v562 = vadd.f32 %v465, %v561
          %v563 = vpop.f32.mrb[0].mxu0
          %564 = vdwg.mxu0
          %v565 = vld [vmem:[%s6] sm:$0xff]
          %v566 = vld [vmem:[%s6 + $0x8] sm:$0xff]
          %v567 = vld [vmem:[%s6 + $0x10] sm:$0xff]
          %v568 = vld [vmem:[%s6 + $0x18] sm:$0xff]
          %570 = vset.pattern.permute.xlu0 0
          %571 = vperm.xlu0 %570, %v565
          %v572 = vpop.permute.xlu0 %571
          %575 = vset.pattern.permute.xlu0 0
          %576 = vperm.xlu0 %575, %v566
          %v577 = vpop.permute.xlu0 %576
          %580 = vset.pattern.permute.xlu0 0
          %581 = vperm.xlu0 %580, %v567
          %v582 = vpop.permute.xlu0 %581
          %585 = vset.pattern.permute.xlu0 0
          %586 = vperm.xlu0 %585, %v568
          %v587 = vpop.permute.xlu0 %586
          %v589 = vmul.f32 %v547, %v572
          %v590 = vmul.f32 %v552, %v577
          %v591 = vmul.f32 %v557, %v582
          %v592 = vmul.f32 %v562, %v587
          %v593 = vadd.f32 %v589, %v590
          %v594 = vadd.f32 %v593, %v591
          %v595 = vadd.f32 %v594, %v592
          %v596 = vrot.slane %v595, 4
          %v597 = vadd.f32 %v595, %v596
          %v598 = vrot.slane %v597, 2
          %v599 = vadd.f32 %v597, %v598
          %v600 = vrot.slane %v599, 1
          %v601 = vadd.f32 %v599, %v600
          %v602 = vld [vmem:[%s7] sm:$0xff]
          %v603 = vld [vmem:[%s7 + $0x8] sm:$0xff]
          %v604 = vld [vmem:[%s7 + $0x10] sm:$0xff]
          %v605 = vld [vmem:[%s7 + $0x18] sm:$0xff]
          %607 = vset.pattern.permute.xlu0 0
          %608 = vperm.xlu0 %607, %v602
          %v609 = vpop.permute.xlu0 %608
          %612 = vset.pattern.permute.xlu0 0
          %613 = vperm.xlu0 %612, %v603
          %v614 = vpop.permute.xlu0 %613
          %617 = vset.pattern.permute.xlu0 0
          %618 = vperm.xlu0 %617, %v604
          %v619 = vpop.permute.xlu0 %618
          %622 = vset.pattern.permute.xlu0 0
          %623 = vperm.xlu0 %622, %v605
          %v624 = vpop.permute.xlu0 %623
          %v626 = vmul.f32 %v547, %v609
          %v627 = vmul.f32 %v552, %v614
          %v628 = vmul.f32 %v557, %v619
          %v629 = vmul.f32 %v562, %v624
          %v630 = vadd.f32 %v626, %v627
          %v631 = vadd.f32 %v630, %v628
          %v632 = vadd.f32 %v631, %v629
          %v633 = vrot.slane %v632, 4
          %v634 = vadd.f32 %v632, %v633
          %v635 = vrot.slane %v634, 2
          %v636 = vadd.f32 %v634, %v635
          %v637 = vrot.slane %v636, 1
          %v638 = vadd.f32 %v636, %v637
          %vm639 = vcmask 1040384
          %v640 = vsel %vm639, %v601, %v638
          %vm641 = vcmask 1041408
          %v642 = vsel %vm641, %v640, 0.0
          %v643 = vpack.c.bf16 %v642, %v642
          %v644 = vunpack.c.l.bf16 %v643
          %v645 = vsub.f32 %v642, %v644
          %v646 = vpack.c.bf16 %v645, %v645
          %v648 = vrot.slane %v646, 4
          %vm649 = vcmask 1043456
          %v652 = vsel %vm649, %v643, %v648
          %654 = vst [vmem:[#allocation2] sm:$0xff] %v652
        $region56: #{tpu_custom_call.1} parent=51 // pred_fallthru
          _
        %v655 = vld [vmem:[%s300] sm:$0x3]
        %v656 = vlaneseq
        %v657 = vshrl.u32 %v656, 7
        %v658 = vadd.s32 %v657, 8
        %v659 = vadd.s32 %v657, 16
        %v660 = vadd.s32 %v657, 24
        %v661 = vadd.s32 %v657, 32
        %v662 = vadd.s32 %v657, 40
        %v663 = vadd.s32 %v657, 48
        %v664 = vadd.s32 %v657, 56
        %v665 = vadd.s32 %v657, 64
        %v666 = vadd.s32 %v657, 72
        %v667 = vadd.s32 %v657, 80
        %v668 = vadd.s32 %v657, 88
        %v669 = vadd.s32 %v657, 96
        %v670 = vadd.s32 %v657, 104
        %v671 = vadd.s32 %v657, 112
        %v672 = vadd.s32 %v657, 120
        %v673 = vlaneseq
        %v674 = vshrl.u32 %v673, 7
        %v675 = vsub.s32 0, %v674
        %v676 = vrot.slane %v655, %v675
        %v677 = vlaneseq
        %v678 = vshrl.u32 %v677, 7
        %v679 = vsub.s32 1, %v678
        %v680 = vrot.slane %v655, %v679
        %vm681 = vcmp.eq.s32.totalorder %v657, %v676
        %vm682 = vcmp.eq.s32.totalorder %v657, %v680
        %vm683 = vcmp.eq.s32.totalorder %v658, %v676
        %vm684 = vcmp.eq.s32.totalorder %v658, %v680
        %vm685 = vcmp.eq.s32.totalorder %v659, %v676
        %vm686 = vcmp.eq.s32.totalorder %v659, %v680
        %vm687 = vcmp.eq.s32.totalorder %v660, %v676
        %vm688 = vcmp.eq.s32.totalorder %v660, %v680
        %vm689 = vcmp.eq.s32.totalorder %v661, %v676
        %vm690 = vcmp.eq.s32.totalorder %v661, %v680
        %vm691 = vcmp.eq.s32.totalorder %v662, %v676
        %vm692 = vcmp.eq.s32.totalorder %v662, %v680
        %vm693 = vcmp.eq.s32.totalorder %v663, %v676
        %vm694 = vcmp.eq.s32.totalorder %v663, %v680
        %vm695 = vcmp.eq.s32.totalorder %v664, %v676
        %vm696 = vcmp.eq.s32.totalorder %v664, %v680
        %vm697 = vcmp.eq.s32.totalorder %v665, %v676
        %vm698 = vcmp.eq.s32.totalorder %v665, %v680
        %vm699 = vcmp.eq.s32.totalorder %v666, %v676
        %vm700 = vcmp.eq.s32.totalorder %v666, %v680
        %vm701 = vcmp.eq.s32.totalorder %v667, %v676
        %vm702 = vcmp.eq.s32.totalorder %v667, %v680
        %vm703 = vcmp.eq.s32.totalorder %v668, %v676
        %vm704 = vcmp.eq.s32.totalorder %v668, %v680
        %vm705 = vcmp.eq.s32.totalorder %v669, %v676
        %vm706 = vcmp.eq.s32.totalorder %v669, %v680
        %vm707 = vcmp.eq.s32.totalorder %v670, %v676
        %vm708 = vcmp.eq.s32.totalorder %v670, %v680
        %vm709 = vcmp.eq.s32.totalorder %v671, %v676
        %vm710 = vcmp.eq.s32.totalorder %v671, %v680
        %vm711 = vcmp.eq.s32.totalorder %v672, %v676
        %vm712 = vcmp.eq.s32.totalorder %v672, %v680
        %v713 = vsel %vm681, 1, 0
        %v714 = vsel %vm682, 1, 0
        %v715 = vsel %vm683, 1, 0
        %v716 = vsel %vm684, 1, 0
        %v717 = vsel %vm685, 1, 0
        %v718 = vsel %vm686, 1, 0
        %v719 = vsel %vm687, 1, 0
        %v720 = vsel %vm688, 1, 0
        %v721 = vsel %vm689, 1, 0
        %v722 = vsel %vm690, 1, 0
        %v723 = vsel %vm691, 1, 0
        %v724 = vsel %vm692, 1, 0
        %v725 = vsel %vm693, 1, 0
        %v726 = vsel %vm694, 1, 0
        %v727 = vsel %vm695, 1, 0
        %v728 = vsel %vm696, 1, 0
        %v729 = vsel %vm697, 1, 0
        %v730 = vsel %vm698, 1, 0
        %v731 = vsel %vm699, 1, 0
        %v732 = vsel %vm700, 1, 0
        %v733 = vsel %vm701, 1, 0
        %v734 = vsel %vm702, 1, 0
        %v735 = vsel %vm703, 1, 0
        %v736 = vsel %vm704, 1, 0
        %v737 = vsel %vm705, 1, 0
        %v738 = vsel %vm706, 1, 0
        %v739 = vsel %vm707, 1, 0
        %v740 = vsel %vm708, 1, 0
        %v741 = vsel %vm709, 1, 0
        %v742 = vsel %vm710, 1, 0
        %v743 = vsel %vm711, 1, 0
        %v744 = vsel %vm712, 1, 0
        %v745 = vcvt.s32.f32 %v713
        %v746 = vcvt.s32.f32 %v714
        %v747 = vcvt.s32.f32 %v715
        %v748 = vcvt.s32.f32 %v716
        %v749 = vcvt.s32.f32 %v717
        %v750 = vcvt.s32.f32 %v718
        %v751 = vcvt.s32.f32 %v719
        %v752 = vcvt.s32.f32 %v720
        %v753 = vcvt.s32.f32 %v721
        %v754 = vcvt.s32.f32 %v722
        %v755 = vcvt.s32.f32 %v723
        %v756 = vcvt.s32.f32 %v724
        %v757 = vcvt.s32.f32 %v725
        %v758 = vcvt.s32.f32 %v726
        %v759 = vcvt.s32.f32 %v727
        %v760 = vcvt.s32.f32 %v728
        %v761 = vcvt.s32.f32 %v729
        %v762 = vcvt.s32.f32 %v730
        %v763 = vcvt.s32.f32 %v731
        %v764 = vcvt.s32.f32 %v732
        %v765 = vcvt.s32.f32 %v733
        %v766 = vcvt.s32.f32 %v734
        %v767 = vcvt.s32.f32 %v735
        %v768 = vcvt.s32.f32 %v736
        %v769 = vcvt.s32.f32 %v737
        %v770 = vcvt.s32.f32 %v738
        %v771 = vcvt.s32.f32 %v739
        %v772 = vcvt.s32.f32 %v740
        %v773 = vcvt.s32.f32 %v741
        %v774 = vcvt.s32.f32 %v742
        %v775 = vcvt.s32.f32 %v743
        %v776 = vcvt.s32.f32 %v744
        %v777 = vpack.c.bf16 %v747, %v745
        %v778 = vpack.c.bf16 %v748, %v746
        %v779 = vpack.c.bf16 %v751, %v749
        %v780 = vpack.c.bf16 %v752, %v750
        %v781 = vpack.c.bf16 %v755, %v753
        %v782 = vpack.c.bf16 %v756, %v754
        %v783 = vpack.c.bf16 %v759, %v757
        %v784 = vpack.c.bf16 %v760, %v758
        %v785 = vpack.c.bf16 %v763, %v761
        %v786 = vpack.c.bf16 %v764, %v762
        %v787 = vpack.c.bf16 %v767, %v765
        %v788 = vpack.c.bf16 %v768, %v766
        %v789 = vpack.c.bf16 %v771, %v769
        %v790 = vpack.c.bf16 %v772, %v770
        %v791 = vpack.c.bf16 %v775, %v773
        %v792 = vpack.c.bf16 %v776, %v774
        %v793 = vld [vmem:[#allocation2] sm:$0xff]
        %794 = vmatprep.subr.bf16.mxu0 %v778
        %795 = vmatpush1.bf16.msra.mxu0 %v777
        %796 = vmatprep.subr.bf16.mxu0 %v780
        %797 = vmatpush1.bf16.msra.mxu0 %v779
        %798 = vmatprep.subr.bf16.mxu0 %v782
        %799 = vmatpush1.bf16.msra.mxu0 %v781
        %800 = vmatprep.subr.bf16.mxu0 %v784
        %801 = vmatpush1.bf16.msra.mxu0 %v783
        %802 = vmatprep.subr.bf16.mxu0 %v786
        %803 = vmatpush1.bf16.msra.mxu0 %v785
        %804 = vmatprep.subr.bf16.mxu0 %v788
        %805 = vmatpush1.bf16.msra.mxu0 %v787
        %806 = vmatprep.subr.bf16.mxu0 %v790
        %807 = vmatpush1.bf16.msra.mxu0 %v789
        %808 = vmatprep.subr.bf16.mxu0 %v792
        %809 = vmatpush1.bf16.msra.mxu0 %v791
        %810 = vmatprep.subr.bf16.mxu0 0
        %811 = vmatpush1.bf16.msra.mxu0 0
        %812 = vmatprep.subr.bf16.mxu0 0
        %813 = vmatpush1.bf16.msra.mxu0 0
        %814 = vmatprep.subr.bf16.mxu0 0
        %815 = vmatpush1.bf16.msra.mxu0 0
        %816 = vmatprep.subr.bf16.mxu0 0
        %817 = vmatpush1.bf16.msra.mxu0 0
        %818 = vmatprep.subr.bf16.mxu0 0
        %819 = vmatpush1.bf16.msra.mxu0 0
        %820 = vmatprep.subr.bf16.mxu0 0
        %821 = vmatpush1.bf16.msra.mxu0 0
        %822 = vmatprep.subr.bf16.mxu0 0
        %823 = vmatpush1.bf16.msra.mxu0 0
        %824 = vmatprep.subr.bf16.mxu0 0
        %825 = vmatpush1.bf16.msra.mxu0 0
        %826 = vmatprep.mubr.bf16.mxu0 0
        %827 = vmatmul.mubr.bf16.gmra.mrb[0].mxu0 %v793
        %v828 = vpop.f32.mrb[0].mxu0
        %v829 = vadd.f32 0.0, %v828
        %v830 = vpop.f32.mrb[0].mxu0
        %v831 = vadd.f32 0.0, %v830
        %v832 = vpop.f32.mrb[0].mxu0
        %v833 = vadd.f32 0.0, %v832
        %v834 = vpop.f32.mrb[0].mxu0
        %v835 = vadd.f32 0.0, %v834
        %836 = vdwg.mxu0
        %v837 = vadd.f32 %v829, %v833
        %v838 = vadd.f32 %v831, %v835
        %v840 = vrot.slane %v838, 1
        %v842 = vadd.f32 %v837, %v840
        %v843 = vtanh.pop %v842
        %844 = vst [vmem:[%s296] sm:$0x1] %v843
        %s845 = sand.u32 %s203, 1
        %s846 = scalar_lea.sflag [#allocation4], %s845
        %s847 = sand.u32 %s203, 1
        %s848 = scalar_lea.vmem [#allocation3], %s847
        // Predicated region
        $region57: #{tpu_custom_call.1} parent=51 // pred_check
          %p849 = pneg %p213
        $region58: #{tpu_custom_call.1} parent=51 // pred_check_branch
          %851 = sbr.rel (%p849) target = $region60
        $region59: #{tpu_custom_call.1} parent=51 // pred_region
          %s853 = ssub.s32 16, 16
          %854 = vsyncadd %s846, %s853
          %s855 = smul.addr %s22, 16
          %s856 = scalar_lea.hbm %s8, %s855
          %s858 = sshll.u32 %s848, 4
          %s859 = int_to_ptr.vmem [resolvable:$true] %s858
          %861 = dma.vmem_to_hbm [thread:$0]  %s859, 16, %s856, %s846
        $region60: #{tpu_custom_call.1} parent=51 // pred_fallthru
          _
      $region52: #{tpu_custom_call.1} parent=5 // pred_fallthru
        _
      %p862 = scmp.le.s32.totalorder 2, %s17
      // Predicated region
      $region61: #{tpu_custom_call.1} parent=5 // pred_check
        %p863 = pneg %p862
      $region62: #{tpu_custom_call.1} parent=5 // pred_check_branch
        %865 = sbr.rel (%p863) target = $region64
      $region63: #{tpu_custom_call.1} parent=5 // pred_region
        %s866 = ssub.s32 %s17, 2
        // Predicated region
        $region65: #{tpu_custom_call.1} parent=63 // pred_check
          %p867 = pneg %p219
        $region66: #{tpu_custom_call.1} parent=63 // pred_check_branch
          %869 = sbr.rel (%p867) target = $region68
        $region67: #{tpu_custom_call.1} parent=63 // pred_region
          %s870 = sand.u32 %s204, 1
          %s871 = scalar_lea.sflag [#allocation4], %s870
          %s872 = sand.u32 %s204, 1
          %s873 = scalar_lea.vmem [#allocation3], %s872
          %874 = dma.done %s871, 16
        $region68: #{tpu_custom_call.1} parent=63 // pred_fallthru
          _
      $region64: #{tpu_custom_call.1} parent=5 // pred_fallthru
        _
    $region6: #{tpu_custom_call.1} parent=1 // loop_footer
      %s21 = sadd.s32 1, %s17
    $region7: #{tpu_custom_call.1} parent=1 // loop_footer_branch
      %16 = sbr.rel target = $region3
    $region8: #{tpu_custom_call.1} parent=1 // loop_exit
      _
    %875 = vsyncpa [#allocation4], 1
    %s876 = scalar_lea.sflag [#allocation4], 1
    %877 = vsyncpa %s876, 1

</llo_original>
